<compile_context>
chip_gen: v7x
topology: tpu7x:2x2x1
jax: 0.10.0
libtpu: 0.0.40
codegen_flags: <defaults>
</compile_context>

<pallas_src>
import jax
import jax.numpy as jnp
from jax.experimental import pallas as pl
from jax.experimental.pallas import tpu as pltpu


def _avgpool1d_kernel(x_ref, w_ref, o_ref):
    """x_ref: (TILE_R, L) VMEM, w_ref: (L, L_out) VMEM, o_ref: (TILE_R, L_out) VMEM."""
    o_ref[...] = jnp.dot(
        x_ref[...],
        w_ref[...],
        preferred_element_type=jnp.float32,
        precision=jax.lax.Precision.HIGHEST,
    ).astype(o_ref.dtype)


def _pick_tile_rows(rows: int, l_in: int, l_out: int, itemsize: int) -> int:
    """Largest multiple-of-8 row tile whose double-buffered in+out tiles fit VMEM."""
    # Per grid step the pipeline double-buffers the input and output tiles:
    #   ~2 * itemsize * TILE_R * (l_in + l_out) bytes.
    # Budget well under the default scoped-VMEM limit on every generation
    # (16 MiB v5e, 32 MiB v6e/v7x; v7x only has 64 MiB physical VMEM), so a
    # single conservative budget works everywhere.
    vmem_budget = 8 * 1024 * 1024
    per_row = max(2 * itemsize * (l_in + l_out), 1)
    tile = (vmem_budget // per_row) // 8 * 8
    tile = min(tile, 1024)                    # diminishing returns past ~512-1024 rows
    tile = min(tile, -(-rows // 8) * 8)       # don't exceed (8-rounded-up) total rows
    return max(tile, 8)


def avgpool1d_meta(x, kernel_size: int, stride=None):
    """JAX/Pallas equivalent of AvgPool1d_meta.forward.  x: (N, C, L)."""
    if stride is None:
        stride = kernel_size
    padding = kernel_size - 1
    if padding % 2 != 0:
        # Mirrors pad_periodic(center=True): even kernel_size is unsupported.
        raise ValueError("cannot do centered padding if padding is not even")
    half = padding // 2

    n, c, l_in = x.shape
    l_padded = l_in + padding
    l_out = (l_padded - kernel_size) // stride + 1        # ceil_mode=False
    rows = n * c

    # Pooling matrix folding periodic padding + window mean:
    #   out[:, j] = (1/k) * sum_d x[:, (j*stride + d - half) mod L]  ==  (x @ W)[:, j]
    starts = jnp.arange(l_out) * stride                            # (l_out,)
    offs = jnp.arange(kernel_size)                                 # (k,)
    src = (starts[None, :] + offs[:, None] - half) % l_in          # (k, l_out)
    w = (src[:, :, None] == jnp.arange(l_in)[None, None, :]).astype(jnp.float32)
    w = (w.sum(axis=0).T * (1.0 / kernel_size)).astype(x.dtype)    # (l_in, l_out)

    x2 = x.reshape(rows, l_in)
    itemsize = jnp.dtype(x.dtype).itemsize
    tile_r = _pick_tile_rows(rows, l_in, l_out, itemsize)

    # TODO(synk): when l_out < 128, fold the output so the stored last dim is a
    # multiple of 128 (lane-dense vst) instead of masked partial stores.

    out2 = pl.pallas_call(
        _avgpool1d_kernel,
        out_shape=jax.ShapeDtypeStruct((rows, l_out), x.dtype),
        grid=(pl.cdiv(rows, tile_r),),
        in_specs=[
            pl.BlockSpec((tile_r, l_in), lambda i: (i, 0)),
            pl.BlockSpec((l_in, l_out), lambda i: (0, 0)),   # tiny, stays resident
        ],
        out_specs=pl.BlockSpec((tile_r, l_out), lambda i: (i, 0)),
        compiler_params=pltpu.CompilerParams(
            dimension_semantics=("parallel",),
        ),
        cost_estimate=pl.CostEstimate(
            flops=2 * rows * l_in * l_out,
            transcendentals=0,
            bytes_accessed=itemsize * (rows * l_in + rows * l_out + l_in * l_out),
        ),
    )(x2, w)

    return out2.reshape(n, c, l_out)


def _reference(x, kernel_size, stride=None):
    """Pure-JAX reference for correctness checking (mirrors the PyTorch module)."""
    if stride is None:
        stride = kernel_size
    padding = kernel_size - 1
    half = padding // 2
    xp = jnp.concatenate([x[..., -half:], x, x[..., :half]], axis=-1) if padding else x
    l_padded = xp.shape[-1]
    l_out = (l_padded - kernel_size) // stride + 1
    outs = [
        jnp.mean(xp[..., j * stride: j * stride + kernel_size], axis=-1)
        for j in range(l_out)
    ]
    return jnp.stack(outs, axis=-1)


if __name__ == "__main__":
    key = jax.random.PRNGKey(0)
    N, C, L = 2, 4, 16
    kernel_size = 3          # odd -> padding = 2 (even), as pad1d_meta requires
    x = jax.random.normal(key, (N, C, L), dtype=jnp.float32)

    out = avgpool1d_meta(x, kernel_size)
    out = jax.block_until_ready(out)

    ref = _reference(x, kernel_size)
    assert out.shape == ref.shape, (out.shape, ref.shape)
    assert jnp.allclose(out, ref, atol=1e-4, rtol=1e-4), float(
        jnp.max(jnp.abs(out - ref))
    )

    print("KERNEL_OK")
</pallas_src>

<mosaic_0001>
module attributes {stable_mosaic.version = 11 : i64} {
  func.func @_avgpool1d_kernel(%arg0: i32, %arg1: memref<8x16xf32, #tpu.memory_space<vmem>>, %arg2: memref<16x6xf32, #tpu.memory_space<vmem>>, %arg3: memref<8x6xf32, #tpu.memory_space<vmem>>) attributes {dimension_semantics = [#tpu.dimension_semantics<parallel>], iteration_bounds = array<i64: 1>, scalar_prefetch = 0 : i64, scratch_operands = 0 : i64, tpu.core_type = #tpu.core_type<tc>, window_params = [{transform_indices = @transform_0, window_bounds = array<i64: 8, 16>}, {pipeline_mode = #tpu.pipeline_mode<synchronous>, transform_indices = @transform_1, window_bounds = array<i64: 16, 6>}, {transform_indices = @transform_2, window_bounds = array<i64: 8, 6>}]} {
    %c0 = arith.constant 0 : index
    %c0_0 = arith.constant 0 : index
    %0 = vector.load %arg1[%c0, %c0_0] : memref<8x16xf32, #tpu.memory_space<vmem>>, vector<8x16xf32>
    %c0_1 = arith.constant 0 : index
    %c0_2 = arith.constant 0 : index
    %1 = vector.load %arg2[%c0_1, %c0_2] : memref<16x6xf32, #tpu.memory_space<vmem>>, vector<16x6xf32>
    %cst = arith.constant dense<0.000000e+00> : vector<8x6xf32>
    %2 = tpu.matmul %0, %1, %cst {dimension_numbers = #tpu.dot_dimension_numbers<[1], [0], [0], [1], [0, 0, 1, 1], [], []>, precision = #tpu.contract_precision<fp32>} : vector<8x16xf32>, vector<16x6xf32>, vector<8x6xf32> -> vector<8x6xf32>
    %c0_3 = arith.constant 0 : index
    %c0_4 = arith.constant 0 : index
    %3 = vector.load %arg3[%c0_3, %c0_4] : memref<8x6xf32, #tpu.memory_space<vmem>>, vector<8x6xf32>
    tpu.vector_store %arg3[%c0_3, %c0_4], %2 {strides = array<i32>} : memref<8x6xf32, #tpu.memory_space<vmem>>, vector<8x6xf32>,
    return
  }
  func.func @transform_0(%arg0: i32) -> (i32, i32) {
    %c0_i32 = arith.constant 0 : i32
    %c0_i32_0 = arith.constant 0 : i32
    return %arg0, %c0_i32 : i32, i32
  }
  func.func @transform_1(%arg0: i32) -> (i32, i32) {
    %c0_i32 = arith.constant 0 : i32
    %c0_i32_0 = arith.constant 0 : i32
    %c0_i32_1 = arith.constant 0 : i32
    return %c0_i32, %c0_i32_0 : i32, i32
  }
  func.func @transform_2(%arg0: i32) -> (i32, i32) {
    %c0_i32 = arith.constant 0 : i32
    %c0_i32_0 = arith.constant 0 : i32
    return %arg0, %c0_i32 : i32, i32
  }
}

</mosaic_0001>

<llo_original>
// kernel: tpu_custom_call.1
$region0: #{tpu_custom_call.1}
  #allocation0 [shape = 'u32[]', space=smem, size = 0x4, offset = 0x4, fixed_abs, tag = 'smem constant byte address 0x4 - core index']
  #allocation1 [shape = 'u32[144,128]{1,0:T(1,128)}', space=vmem, size = 0x12000, scoped, tag = 'internal scratch']
  %s0 = inlined_call_operand.vmem [shape: f32[8,16], index: 0, kind: input, shape index: {}]
  %s1 = inlined_call_operand.vmem [shape: f32[16,6], index: 1, kind: input, shape index: {}]
  %s2 = inlined_call_operand.hbm [shape: f32[8,6], index: 2, kind: output, shape index: {}]
  %s3 = sld [smem:[#allocation0]]
  $region18: #{tpu_custom_call.1} parent=0
    _
  %s5 = ssub.s32 1, %s3
  %s6 = scalar_select 0, %s5, %s3
  $region1: #{tpu_custom_call.1} parent=0
    #allocation2 [shape = 'u8[4096]{0}', space=vmem, size = 0x1000, scoped, tag = 'output window, operand 0, single buffered']
    #allocation3 [shape = 's32[1]{0}', space=sflag, size = 0x4, scoped, tag = 'scoped memory for tpu_custom_call.1']
    %7 = vsyncpa [#allocation3], 0
    // Predicated region
    $region2: #{tpu_custom_call.1} parent=1 // pred_check
      _
    $region3: #{tpu_custom_call.1} parent=1 // pred_check_branch
      %9 = sbr.rel (0) target = $region5
    $region4: #{tpu_custom_call.1} parent=1 // pred_region
      _
    $region5: #{tpu_custom_call.1} parent=1 // pred_fallthru
      _
    // Predicated region
    $region6: #{tpu_custom_call.1} parent=1 // pred_check
      _
    $region7: #{tpu_custom_call.1} parent=1 // pred_check_branch
      %11 = sbr.rel (0) target = $region9
    $region8: #{tpu_custom_call.1} parent=1 // pred_region
      _
    $region9: #{tpu_custom_call.1} parent=1 // pred_fallthru
      _
    %v12 = vld [vmem:[%s0] sm:$0xff]
    %v13 = vld [vmem:[%s1] sm:$0xff]
    %v14 = vld [vmem:[%s1 + $0x8] sm:$0xff]
    %vm15 = vcmask 130048
    %v17 = vsel %vm15, %v12, 0
    %19 = vmatprep.subr.mxu0 0.0
    %v20 = vand.u32 %v13, 4294901760
    %21 = vmatpush1.msra.mxu0 %v20
    %22 = vmatprep.subr.mxu0 0.0
    %v23 = vand.u32 %v14, 4294901760
    %24 = vmatpush1.msra.mxu0 %v23
    %25 = vmatprep.subr.mxu0 0.0
    %26 = vmatpush1.msra.mxu0 0.0
    %27 = vmatprep.subr.mxu0 0.0
    %28 = vmatpush1.msra.mxu0 0.0
    %29 = vmatprep.subr.mxu0 0.0
    %30 = vmatpush1.msra.mxu0 0.0
    %31 = vmatprep.subr.mxu0 0.0
    %32 = vmatpush1.msra.mxu0 0.0
    %33 = vmatprep.subr.mxu0 0.0
    %34 = vmatpush1.msra.mxu0 0.0
    %35 = vmatprep.subr.mxu0 0.0
    %36 = vmatpush1.msra.mxu0 0.0
    %37 = vmatprep.subr.mxu0 0.0
    %38 = vmatpush1.msra.mxu0 0.0
    %39 = vmatprep.subr.mxu0 0.0
    %40 = vmatpush1.msra.mxu0 0.0
    %41 = vmatprep.subr.mxu0 0.0
    %42 = vmatpush1.msra.mxu0 0.0
    %43 = vmatprep.subr.mxu0 0.0
    %44 = vmatpush1.msra.mxu0 0.0
    %45 = vmatprep.subr.mxu0 0.0
    %46 = vmatpush1.msra.mxu0 0.0
    %47 = vmatprep.subr.mxu0 0.0
    %48 = vmatpush1.msra.mxu0 0.0
    %49 = vmatprep.subr.mxu0 0.0
    %50 = vmatpush1.msra.mxu0 0.0
    %51 = vmatprep.subr.mxu0 0.0
    %52 = vmatpush1.msra.mxu0 0.0
    %53 = vmatprep.subr.mxu0 0.0
    %54 = vmatpush1.msra.mxu0 0.0
    %55 = vmatprep.subr.mxu0 0.0
    %56 = vmatpush1.msra.mxu0 0.0
    %57 = vmatprep.subr.mxu0 0.0
    %58 = vmatpush1.msra.mxu0 0.0
    %59 = vmatprep.subr.mxu0 0.0
    %60 = vmatpush1.msra.mxu0 0.0
    %61 = vmatprep.subr.mxu0 0.0
    %62 = vmatpush1.msra.mxu0 0.0
    %63 = vmatprep.subr.mxu0 0.0
    %64 = vmatpush1.msra.mxu0 0.0
    %65 = vmatprep.subr.mxu0 0.0
    %66 = vmatpush1.msra.mxu0 0.0
    %67 = vmatprep.subr.mxu0 0.0
    %68 = vmatpush1.msra.mxu0 0.0
    %69 = vmatprep.subr.mxu0 0.0
    %70 = vmatpush1.msra.mxu0 0.0
    %71 = vmatprep.subr.mxu0 0.0
    %72 = vmatpush1.msra.mxu0 0.0
    %73 = vmatprep.subr.mxu0 0.0
    %74 = vmatpush1.msra.mxu0 0.0
    %75 = vmatprep.subr.mxu0 0.0
    %76 = vmatpush1.msra.mxu0 0.0
    %77 = vmatprep.subr.mxu0 0.0
    %78 = vmatpush1.msra.mxu0 0.0
    %79 = vmatprep.subr.mxu0 0.0
    %80 = vmatpush1.msra.mxu0 0.0
    %81 = vmatprep.subr.mxu0 0.0
    %82 = vmatpush1.msra.mxu0 0.0
    %83 = vmatprep.subr.mxu0 0.0
    %84 = vmatpush1.msra.mxu0 0.0
    %85 = vmatprep.mubr.f32.mxu0 0.0
    %v86 = vand.u32 %v17, 4294901760
    %v87 = vsub.f32 %v17, %v86
    %v88 = vand.u32 %v87, 4294901760
    %v89 = vsub.f32 %v87, %v88
    %v90 = vand.u32 %v89, 4294901760
    %91 = vmatmul.mubr.f32.gmra.mrb[0].mxu0 %v90
    %v92 = vpop.f32.mrb[0].mxu0
    %v93 = vadd.f32 0.0, %v92
    %v94 = vpop.f32.mrb[0].mxu0
    %95 = vdwg.mxu0
    %96 = vmatprep.subr.mxu0 0.0
    %v97 = vand.u32 %v13, 4294901760
    %v98 = vsub.f32 %v13, %v97
    %v99 = vand.u32 %v98, 4294901760
    %v100 = vsub.f32 %v98, %v99
    %v101 = vand.u32 %v100, 4294901760
    %102 = vmatpush1.msra.mxu0 %v101
    %103 = vmatprep.subr.mxu0 0.0
    %v104 = vand.u32 %v14, 4294901760
    %v105 = vsub.f32 %v14, %v104
    %v106 = vand.u32 %v105, 4294901760
    %v107 = vsub.f32 %v105, %v106
    %v108 = vand.u32 %v107, 4294901760
    %109 = vmatpush1.msra.mxu0 %v108
    %110 = vmatprep.subr.mxu0 0.0
    %111 = vmatpush1.msra.mxu0 0.0
    %112 = vmatprep.subr.mxu0 0.0
    %113 = vmatpush1.msra.mxu0 0.0
    %114 = vmatprep.subr.mxu0 0.0
    %115 = vmatpush1.msra.mxu0 0.0
    %116 = vmatprep.subr.mxu0 0.0
    %117 = vmatpush1.msra.mxu0 0.0
    %118 = vmatprep.subr.mxu0 0.0
    %119 = vmatpush1.msra.mxu0 0.0
    %120 = vmatprep.subr.mxu0 0.0
    %121 = vmatpush1.msra.mxu0 0.0
    %122 = vmatprep.subr.mxu0 0.0
    %123 = vmatpush1.msra.mxu0 0.0
    %124 = vmatprep.subr.mxu0 0.0
    %125 = vmatpush1.msra.mxu0 0.0
    %126 = vmatprep.subr.mxu0 0.0
    %127 = vmatpush1.msra.mxu0 0.0
    %128 = vmatprep.subr.mxu0 0.0
    %129 = vmatpush1.msra.mxu0 0.0
    %130 = vmatprep.subr.mxu0 0.0
    %131 = vmatpush1.msra.mxu0 0.0
    %132 = vmatprep.subr.mxu0 0.0
    %133 = vmatpush1.msra.mxu0 0.0
    %134 = vmatprep.subr.mxu0 0.0
    %135 = vmatpush1.msra.mxu0 0.0
    %136 = vmatprep.subr.mxu0 0.0
    %137 = vmatpush1.msra.mxu0 0.0
    %138 = vmatprep.subr.mxu0 0.0
    %139 = vmatpush1.msra.mxu0 0.0
    %140 = vmatprep.subr.mxu0 0.0
    %141 = vmatpush1.msra.mxu0 0.0
    %142 = vmatprep.subr.mxu0 0.0
    %143 = vmatpush1.msra.mxu0 0.0
    %144 = vmatprep.subr.mxu0 0.0
    %145 = vmatpush1.msra.mxu0 0.0
    %146 = vmatprep.subr.mxu0 0.0
    %147 = vmatpush1.msra.mxu0 0.0
    %148 = vmatprep.subr.mxu0 0.0
    %149 = vmatpush1.msra.mxu0 0.0
    %150 = vmatprep.subr.mxu0 0.0
    %151 = vmatpush1.msra.mxu0 0.0
    %152 = vmatprep.subr.mxu0 0.0
    %153 = vmatpush1.msra.mxu0 0.0
    %154 = vmatprep.subr.mxu0 0.0
    %155 = vmatpush1.msra.mxu0 0.0
    %156 = vmatprep.subr.mxu0 0.0
    %157 = vmatpush1.msra.mxu0 0.0
    %158 = vmatprep.subr.mxu0 0.0
    %159 = vmatpush1.msra.mxu0 0.0
    %160 = vmatprep.subr.mxu0 0.0
    %161 = vmatpush1.msra.mxu0 0.0
    %162 = vmatprep.subr.mxu0 0.0
    %163 = vmatpush1.msra.mxu0 0.0
    %164 = vmatprep.subr.mxu0 0.0
    %165 = vmatpush1.msra.mxu0 0.0
    %166 = vmatprep.subr.mxu0 0.0
    %167 = vmatpush1.msra.mxu0 0.0
    %168 = vmatprep.subr.mxu0 0.0
    %169 = vmatpush1.msra.mxu0 0.0
    %170 = vmatprep.mubr.f32.mxu0 0.0
    %v171 = vand.u32 %v17, 4294901760
    %172 = vmatmul.mubr.f32.gmra.mrb[0].mxu0 %v171
    %v173 = vpop.f32.mrb[0].mxu0
    %v174 = vadd.f32 %v93, %v173
    %v175 = vpop.f32.mrb[0].mxu0
    %176 = vdwg.mxu0
    %177 = vmatprep.subr.mxu0 0.0
    %v178 = vand.u32 %v13, 4294901760
    %v179 = vsub.f32 %v13, %v178
    %180 = vmatpush1.msra.mxu0 %v179
    %181 = vmatprep.subr.mxu0 0.0
    %v182 = vand.u32 %v14, 4294901760
    %v183 = vsub.f32 %v14, %v182
    %184 = vmatpush1.msra.mxu0 %v183
    %185 = vmatprep.subr.mxu0 0.0
    %186 = vmatpush1.msra.mxu0 0.0
    %187 = vmatprep.subr.mxu0 0.0
    %188 = vmatpush1.msra.mxu0 0.0
    %189 = vmatprep.subr.mxu0 0.0
    %190 = vmatpush1.msra.mxu0 0.0
    %191 = vmatprep.subr.mxu0 0.0
    %192 = vmatpush1.msra.mxu0 0.0
    %193 = vmatprep.subr.mxu0 0.0
    %194 = vmatpush1.msra.mxu0 0.0
    %195 = vmatprep.subr.mxu0 0.0
    %196 = vmatpush1.msra.mxu0 0.0
    %197 = vmatprep.subr.mxu0 0.0
    %198 = vmatpush1.msra.mxu0 0.0
    %199 = vmatprep.subr.mxu0 0.0
    %200 = vmatpush1.msra.mxu0 0.0
    %201 = vmatprep.subr.mxu0 0.0
    %202 = vmatpush1.msra.mxu0 0.0
    %203 = vmatprep.subr.mxu0 0.0
    %204 = vmatpush1.msra.mxu0 0.0
    %205 = vmatprep.subr.mxu0 0.0
    %206 = vmatpush1.msra.mxu0 0.0
    %207 = vmatprep.subr.mxu0 0.0
    %208 = vmatpush1.msra.mxu0 0.0
    %209 = vmatprep.subr.mxu0 0.0
    %210 = vmatpush1.msra.mxu0 0.0
    %211 = vmatprep.subr.mxu0 0.0
    %212 = vmatpush1.msra.mxu0 0.0
    %213 = vmatprep.subr.mxu0 0.0
    %214 = vmatpush1.msra.mxu0 0.0
    %215 = vmatprep.subr.mxu0 0.0
    %216 = vmatpush1.msra.mxu0 0.0
    %217 = vmatprep.subr.mxu0 0.0
    %218 = vmatpush1.msra.mxu0 0.0
    %219 = vmatprep.subr.mxu0 0.0
    %220 = vmatpush1.msra.mxu0 0.0
    %221 = vmatprep.subr.mxu0 0.0
    %222 = vmatpush1.msra.mxu0 0.0
    %223 = vmatprep.subr.mxu0 0.0
    %224 = vmatpush1.msra.mxu0 0.0
    %225 = vmatprep.subr.mxu0 0.0
    %226 = vmatpush1.msra.mxu0 0.0
    %227 = vmatprep.subr.mxu0 0.0
    %228 = vmatpush1.msra.mxu0 0.0
    %229 = vmatprep.subr.mxu0 0.0
    %230 = vmatpush1.msra.mxu0 0.0
    %231 = vmatprep.subr.mxu0 0.0
    %232 = vmatpush1.msra.mxu0 0.0
    %233 = vmatprep.subr.mxu0 0.0
    %234 = vmatpush1.msra.mxu0 0.0
    %235 = vmatprep.subr.mxu0 0.0
    %236 = vmatpush1.msra.mxu0 0.0
    %237 = vmatprep.subr.mxu0 0.0
    %238 = vmatpush1.msra.mxu0 0.0
    %239 = vmatprep.subr.mxu0 0.0
    %240 = vmatpush1.msra.mxu0 0.0
    %241 = vmatprep.subr.mxu0 0.0
    %242 = vmatpush1.msra.mxu0 0.0
    %243 = vmatprep.subr.mxu0 0.0
    %244 = vmatpush1.msra.mxu0 0.0
    %245 = vmatprep.mubr.f32.mxu0 0.0
    %v246 = vand.u32 %v17, 4294901760
    %v247 = vsub.f32 %v17, %v246
    %248 = vmatmul.mubr.f32.gmra.mrb[0].mxu0 %v247
    %v249 = vpop.f32.mrb[0].mxu0
    %v250 = vadd.f32 %v174, %v249
    %v251 = vpop.f32.mrb[0].mxu0
    %252 = vdwg.mxu0
    %253 = vmatprep.subr.mxu0 0.0
    %v254 = vand.u32 %v13, 4294901760
    %255 = vmatpush1.msra.mxu0 %v254
    %256 = vmatprep.subr.mxu0 0.0
    %v257 = vand.u32 %v14, 4294901760
    %258 = vmatpush1.msra.mxu0 %v257
    %259 = vmatprep.subr.mxu0 0.0
    %260 = vmatpush1.msra.mxu0 0.0
    %261 = vmatprep.subr.mxu0 0.0
    %262 = vmatpush1.msra.mxu0 0.0
    %263 = vmatprep.subr.mxu0 0.0
    %264 = vmatpush1.msra.mxu0 0.0
    %265 = vmatprep.subr.mxu0 0.0
    %266 = vmatpush1.msra.mxu0 0.0
    %267 = vmatprep.subr.mxu0 0.0
    %268 = vmatpush1.msra.mxu0 0.0
    %269 = vmatprep.subr.mxu0 0.0
    %270 = vmatpush1.msra.mxu0 0.0
    %271 = vmatprep.subr.mxu0 0.0
    %272 = vmatpush1.msra.mxu0 0.0
    %273 = vmatprep.subr.mxu0 0.0
    %274 = vmatpush1.msra.mxu0 0.0
    %275 = vmatprep.subr.mxu0 0.0
    %276 = vmatpush1.msra.mxu0 0.0
    %277 = vmatprep.subr.mxu0 0.0
    %278 = vmatpush1.msra.mxu0 0.0
    %279 = vmatprep.subr.mxu0 0.0
    %280 = vmatpush1.msra.mxu0 0.0
    %281 = vmatprep.subr.mxu0 0.0
    %282 = vmatpush1.msra.mxu0 0.0
    %283 = vmatprep.subr.mxu0 0.0
    %284 = vmatpush1.msra.mxu0 0.0
    %285 = vmatprep.subr.mxu0 0.0
    %286 = vmatpush1.msra.mxu0 0.0
    %287 = vmatprep.subr.mxu0 0.0
    %288 = vmatpush1.msra.mxu0 0.0
    %289 = vmatprep.subr.mxu0 0.0
    %290 = vmatpush1.msra.mxu0 0.0
    %291 = vmatprep.subr.mxu0 0.0
    %292 = vmatpush1.msra.mxu0 0.0
    %293 = vmatprep.subr.mxu0 0.0
    %294 = vmatpush1.msra.mxu0 0.0
    %295 = vmatprep.subr.mxu0 0.0
    %296 = vmatpush1.msra.mxu0 0.0
    %297 = vmatprep.subr.mxu0 0.0
    %298 = vmatpush1.msra.mxu0 0.0
    %299 = vmatprep.subr.mxu0 0.0
    %300 = vmatpush1.msra.mxu0 0.0
    %301 = vmatprep.subr.mxu0 0.0
    %302 = vmatpush1.msra.mxu0 0.0
    %303 = vmatprep.subr.mxu0 0.0
    %304 = vmatpush1.msra.mxu0 0.0
    %305 = vmatprep.subr.mxu0 0.0
    %306 = vmatpush1.msra.mxu0 0.0
    %307 = vmatprep.subr.mxu0 0.0
    %308 = vmatpush1.msra.mxu0 0.0
    %309 = vmatprep.subr.mxu0 0.0
    %310 = vmatpush1.msra.mxu0 0.0
    %311 = vmatprep.subr.mxu0 0.0
    %312 = vmatpush1.msra.mxu0 0.0
    %313 = vmatprep.subr.mxu0 0.0
    %314 = vmatpush1.msra.mxu0 0.0
    %315 = vmatprep.subr.mxu0 0.0
    %316 = vmatpush1.msra.mxu0 0.0
    %317 = vmatprep.subr.mxu0 0.0
    %318 = vmatpush1.msra.mxu0 0.0
    %319 = vmatprep.mubr.f32.mxu0 0.0
    %v320 = vand.u32 %v17, 4294901760
    %v321 = vsub.f32 %v17, %v320
    %v322 = vand.u32 %v321, 4294901760
    %323 = vmatmul.mubr.f32.gmra.mrb[0].mxu0 %v322
    %v324 = vpop.f32.mrb[0].mxu0
    %v325 = vadd.f32 %v250, %v324
    %v326 = vpop.f32.mrb[0].mxu0
    %327 = vdwg.mxu0
    %328 = vmatprep.subr.mxu0 0.0
    %v329 = vand.u32 %v13, 4294901760
    %v330 = vsub.f32 %v13, %v329
    %v331 = vand.u32 %v330, 4294901760
    %332 = vmatpush1.msra.mxu0 %v331
    %333 = vmatprep.subr.mxu0 0.0
    %v334 = vand.u32 %v14, 4294901760
    %v335 = vsub.f32 %v14, %v334
    %v336 = vand.u32 %v335, 4294901760
    %337 = vmatpush1.msra.mxu0 %v336
    %338 = vmatprep.subr.mxu0 0.0
    %339 = vmatpush1.msra.mxu0 0.0
    %340 = vmatprep.subr.mxu0 0.0
    %341 = vmatpush1.msra.mxu0 0.0
    %342 = vmatprep.subr.mxu0 0.0
    %343 = vmatpush1.msra.mxu0 0.0
    %344 = vmatprep.subr.mxu0 0.0
    %345 = vmatpush1.msra.mxu0 0.0
    %346 = vmatprep.subr.mxu0 0.0
    %347 = vmatpush1.msra.mxu0 0.0
    %348 = vmatprep.subr.mxu0 0.0
    %349 = vmatpush1.msra.mxu0 0.0
    %350 = vmatprep.subr.mxu0 0.0
    %351 = vmatpush1.msra.mxu0 0.0
    %352 = vmatprep.subr.mxu0 0.0
    %353 = vmatpush1.msra.mxu0 0.0
    %354 = vmatprep.subr.mxu0 0.0
    %355 = vmatpush1.msra.mxu0 0.0
    %356 = vmatprep.subr.mxu0 0.0
    %357 = vmatpush1.msra.mxu0 0.0
    %358 = vmatprep.subr.mxu0 0.0
    %359 = vmatpush1.msra.mxu0 0.0
    %360 = vmatprep.subr.mxu0 0.0
    %361 = vmatpush1.msra.mxu0 0.0
    %362 = vmatprep.subr.mxu0 0.0
    %363 = vmatpush1.msra.mxu0 0.0
    %364 = vmatprep.subr.mxu0 0.0
    %365 = vmatpush1.msra.mxu0 0.0
    %366 = vmatprep.subr.mxu0 0.0
    %367 = vmatpush1.msra.mxu0 0.0
    %368 = vmatprep.subr.mxu0 0.0
    %369 = vmatpush1.msra.mxu0 0.0
    %370 = vmatprep.subr.mxu0 0.0
    %371 = vmatpush1.msra.mxu0 0.0
    %372 = vmatprep.subr.mxu0 0.0
    %373 = vmatpush1.msra.mxu0 0.0
    %374 = vmatprep.subr.mxu0 0.0
    %375 = vmatpush1.msra.mxu0 0.0
    %376 = vmatprep.subr.mxu0 0.0
    %377 = vmatpush1.msra.mxu0 0.0
    %378 = vmatprep.subr.mxu0 0.0
    %379 = vmatpush1.msra.mxu0 0.0
    %380 = vmatprep.subr.mxu0 0.0
    %381 = vmatpush1.msra.mxu0 0.0
    %382 = vmatprep.subr.mxu0 0.0
    %383 = vmatpush1.msra.mxu0 0.0
    %384 = vmatprep.subr.mxu0 0.0
    %385 = vmatpush1.msra.mxu0 0.0
    %386 = vmatprep.subr.mxu0 0.0
    %387 = vmatpush1.msra.mxu0 0.0
    %388 = vmatprep.subr.mxu0 0.0
    %389 = vmatpush1.msra.mxu0 0.0
    %390 = vmatprep.subr.mxu0 0.0
    %391 = vmatpush1.msra.mxu0 0.0
    %392 = vmatprep.subr.mxu0 0.0
    %393 = vmatpush1.msra.mxu0 0.0
    %394 = vmatprep.subr.mxu0 0.0
    %395 = vmatpush1.msra.mxu0 0.0
    %396 = vmatprep.subr.mxu0 0.0
    %397 = vmatpush1.msra.mxu0 0.0
    %398 = vmatprep.mubr.f32.mxu0 0.0
    %v399 = vand.u32 %v17, 4294901760
    %400 = vmatmul.mubr.f32.gmra.mrb[0].mxu0 %v399
    %v401 = vpop.f32.mrb[0].mxu0
    %v402 = vadd.f32 %v325, %v401
    %v403 = vpop.f32.mrb[0].mxu0
    %404 = vdwg.mxu0
    %405 = vmatprep.subr.mxu0 0.0
    %v406 = vand.u32 %v13, 4294901760
    %407 = vmatpush1.msra.mxu0 %v406
    %408 = vmatprep.subr.mxu0 0.0
    %v409 = vand.u32 %v14, 4294901760
    %410 = vmatpush1.msra.mxu0 %v409
    %411 = vmatprep.subr.mxu0 0.0
    %412 = vmatpush1.msra.mxu0 0.0
    %413 = vmatprep.subr.mxu0 0.0
    %414 = vmatpush1.msra.mxu0 0.0
    %415 = vmatprep.subr.mxu0 0.0
    %416 = vmatpush1.msra.mxu0 0.0
    %417 = vmatprep.subr.mxu0 0.0
    %418 = vmatpush1.msra.mxu0 0.0
    %419 = vmatprep.subr.mxu0 0.0
    %420 = vmatpush1.msra.mxu0 0.0
    %421 = vmatprep.subr.mxu0 0.0
    %422 = vmatpush1.msra.mxu0 0.0
    %423 = vmatprep.subr.mxu0 0.0
    %424 = vmatpush1.msra.mxu0 0.0
    %425 = vmatprep.subr.mxu0 0.0
    %426 = vmatpush1.msra.mxu0 0.0
    %427 = vmatprep.subr.mxu0 0.0
    %428 = vmatpush1.msra.mxu0 0.0
    %429 = vmatprep.subr.mxu0 0.0
    %430 = vmatpush1.msra.mxu0 0.0
    %431 = vmatprep.subr.mxu0 0.0
    %432 = vmatpush1.msra.mxu0 0.0
    %433 = vmatprep.subr.mxu0 0.0
    %434 = vmatpush1.msra.mxu0 0.0
    %435 = vmatprep.subr.mxu0 0.0
    %436 = vmatpush1.msra.mxu0 0.0
    %437 = vmatprep.subr.mxu0 0.0
    %438 = vmatpush1.msra.mxu0 0.0
    %439 = vmatprep.subr.mxu0 0.0
    %440 = vmatpush1.msra.mxu0 0.0
    %441 = vmatprep.subr.mxu0 0.0
    %442 = vmatpush1.msra.mxu0 0.0
    %443 = vmatprep.subr.mxu0 0.0
    %444 = vmatpush1.msra.mxu0 0.0
    %445 = vmatprep.subr.mxu0 0.0
    %446 = vmatpush1.msra.mxu0 0.0
    %447 = vmatprep.subr.mxu0 0.0
    %448 = vmatpush1.msra.mxu0 0.0
    %449 = vmatprep.subr.mxu0 0.0
    %450 = vmatpush1.msra.mxu0 0.0
    %451 = vmatprep.subr.mxu0 0.0
    %452 = vmatpush1.msra.mxu0 0.0
    %453 = vmatprep.subr.mxu0 0.0
    %454 = vmatpush1.msra.mxu0 0.0
    %455 = vmatprep.subr.mxu0 0.0
    %456 = vmatpush1.msra.mxu0 0.0
    %457 = vmatprep.subr.mxu0 0.0
    %458 = vmatpush1.msra.mxu0 0.0
    %459 = vmatprep.subr.mxu0 0.0
    %460 = vmatpush1.msra.mxu0 0.0
    %461 = vmatprep.subr.mxu0 0.0
    %462 = vmatpush1.msra.mxu0 0.0
    %463 = vmatprep.subr.mxu0 0.0
    %464 = vmatpush1.msra.mxu0 0.0
    %465 = vmatprep.subr.mxu0 0.0
    %466 = vmatpush1.msra.mxu0 0.0
    %467 = vmatprep.subr.mxu0 0.0
    %468 = vmatpush1.msra.mxu0 0.0
    %469 = vmatprep.subr.mxu0 0.0
    %470 = vmatpush1.msra.mxu0 0.0
    %471 = vmatprep.mubr.f32.mxu0 0.0
    %v472 = vand.u32 %v17, 4294901760
    %473 = vmatmul.mubr.f32.gmra.mrb[0].mxu0 %v472
    %v474 = vpop.f32.mrb[0].mxu0
    %v475 = vadd.f32 %v402, %v474
    %v476 = vpop.f32.mrb[0].mxu0
    %477 = vdwg.mxu0
    %vm478 = vcmask 48128
    %479 = vst.msk [vmem:[#allocation2] sm:$0xff] %vm478, %v475
    // Predicated region
    $region10: #{tpu_custom_call.1} parent=1 // pred_check
      _
    $region11: #{tpu_custom_call.1} parent=1 // pred_check_branch
      %481 = sbr.rel (0) target = $region13
    $region12: #{tpu_custom_call.1} parent=1 // pred_region
      %s483 = ssub.s32 128, 128
      %484 = vsyncadd [#allocation3], %s483
      %s486 = sshll.u32 [#allocation2], 4
      %s487 = int_to_ptr.vmem [resolvable:$true] %s486
      %489 = dma.vmem_to_hbm [thread:$0]  %s487, 128, %s2, [#allocation3]
    $region13: #{tpu_custom_call.1} parent=1 // pred_fallthru
      _
    // Predicated region
    $region14: #{tpu_custom_call.1} parent=1 // pred_check
      _
    $region15: #{tpu_custom_call.1} parent=1 // pred_check_branch
      %491 = sbr.rel (0) target = $region17
    $region16: #{tpu_custom_call.1} parent=1 // pred_region
      %492 = dma.done [#allocation3], 128
    $region17: #{tpu_custom_call.1} parent=1 // pred_fallthru
      _
    %493 = vsyncpa [#allocation3], 1

</llo_original>
